<compile_context>
chip_gen: v6e
topology: v6e:2x2x1
jax: 0.10.0
libtpu: 0.0.40
codegen_flags: <defaults>
</compile_context>

<pallas_src>
import functools

import jax
import jax.numpy as jnp
from jax.experimental import pallas as pl
from jax.experimental.pallas import tpu as pltpu


def _round_up(a, b):
    return ((a + b - 1) // b) * b


# ------------------------------------------------------------------ kernel
def _context_mlp_kernel(x_ref,
                        w1, b1, a1,      # fused layer 1 (block-diag) + PReLU alphas
                        w2, b2, a2,      # fused layer 2 (block-diag) + PReLU alphas
                        w3, b3,          # fused layer 3 (block-diag, BN folded in)
                        out_ref):
    f32 = jnp.float32
    x = x_ref[...]                                               # (tm, C)

    h = jnp.dot(x, w1[...], preferred_element_type=f32) + b1[...]     # (tm, 80)
    h = jnp.where(h >= 0, h, a1[...] * h)                              # PReLU (Dropout = id, eval)

    h = jnp.dot(h, w2[...], preferred_element_type=f32) + b2[...]     # (tm, 48)
    h = jnp.where(h >= 0, h, a2[...] * h)                              # PReLU

    # Third matmul already produces concat([x1, x2], dim=1) because W3 is
    # block-diagonal -> single full-width lane-dense store.
    out_ref[...] = jnp.dot(h, w3[...], preferred_element_type=f32) + b3[...]


# ------------------------------------------------------------------ parameters
def init_params(key, num_channels, num_raw, context_size):
    """Deterministic synthetic parameters with the shapes of the PyTorch module."""
    num_maps = num_channels - num_raw
    keys = iter(jax.random.split(key, 64))

    def nrm(shape, scale=0.1):
        return scale * jax.random.normal(next(keys), shape, dtype=jnp.float32)

    p = {}
    # ---- fc : Linear(num_raw,64) PReLU Drop Linear(64,32) PReLU BN(32) Drop Linear(32,ctx)
    p["w1"] = nrm((num_raw, 64));  p["b1"] = nrm((1, 64), 0.01);  p["a1"] = jnp.float32(0.25)
    p["w2"] = nrm((64, 32));       p["b2"] = nrm((1, 32), 0.01);  p["a2"] = jnp.float32(0.25)
    p["bn1_g"] = 1.0 + nrm((32,), 0.01)
    p["bn1_b"] = nrm((32,), 0.01)
    p["bn1_m"] = nrm((32,), 0.05)
    p["bn1_v"] = 1.0 + jax.nn.softplus(nrm((32,), 0.1))
    p["w3"] = nrm((32, context_size)); p["b3"] = nrm((1, context_size), 0.01)
    # ---- fc2: Linear(num_maps,16) PReLU Drop Linear(16,16) PReLU BN(16) Drop Linear(16,8)
    p["v1"] = nrm((num_maps, 16)); p["c1"] = nrm((1, 16), 0.01);  p["a3"] = jnp.float32(0.25)
    p["v2"] = nrm((16, 16));       p["c2"] = nrm((1, 16), 0.01);  p["a4"] = jnp.float32(0.25)
    p["bn2_g"] = 1.0 + nrm((16,), 0.01)
    p["bn2_b"] = nrm((16,), 0.01)
    p["bn2_m"] = nrm((16,), 0.05)
    p["bn2_v"] = 1.0 + jax.nn.softplus(nrm((16,), 0.1))
    p["v3"] = nrm((16, 8));        p["c3"] = nrm((1, 8), 0.01)
    return p


def prepare_params(p, eps=1e-5):
    """Fold eval-mode BN into the last Linear of each branch, then fuse the two
    branches into block-diagonal weights so the kernel is 3 matmuls total."""
    # BN fold, branch 1:  y = h*s1 + t1  ->  x1 = h @ (s1[:,None]*w3) + (t1@w3 + b3)
    s1 = p["bn1_g"] * jax.lax.rsqrt(p["bn1_v"] + eps)
    t1 = p["bn1_b"] - p["bn1_m"] * s1
    w3f = p["w3"] * s1[:, None]
    b3f = p["b3"] + t1[None, :] @ p["w3"]
    # BN fold, branch 2
    s2 = p["bn2_g"] * jax.lax.rsqrt(p["bn2_v"] + eps)
    t2 = p["bn2_b"] - p["bn2_m"] * s2
    v3f = p["v3"] * s2[:, None]
    c3f = p["c3"] + t2[None, :] @ p["v3"]

    num_raw, h1a = p["w1"].shape          # (num_raw, 64)
    num_maps, h1b = p["v1"].shape         # (num_maps, 16)
    h2a = p["w2"].shape[1]                # 32
    h2b = p["v2"].shape[1]                # 16
    ctx = p["w3"].shape[1]
    o2 = p["v3"].shape[1]                 # 8

    C = num_raw + num_maps
    f32 = jnp.float32

    # Layer 1: (C, 80) block-diagonal.
    W1 = jnp.zeros((C, h1a + h1b), f32)
    W1 = W1.at[:num_raw, :h1a].set(p["w1"]).at[num_raw:, h1a:].set(p["v1"])
    B1 = jnp.concatenate([p["b1"], p["c1"]], axis=1)                         # (1, 80)
    A1 = jnp.concatenate([jnp.full((1, h1a), p["a1"], f32),
                          jnp.full((1, h1b), p["a3"], f32)], axis=1)         # (1, 80)

    # Layer 2: (80, 48) block-diagonal.
    W2 = jnp.zeros((h1a + h1b, h2a + h2b), f32)
    W2 = W2.at[:h1a, :h2a].set(p["w2"]).at[h1a:, h2a:].set(p["v2"])
    B2 = jnp.concatenate([p["b2"], p["c2"]], axis=1)                         # (1, 48)
    A2 = jnp.concatenate([jnp.full((1, h2a), p["a2"], f32),
                          jnp.full((1, h2b), p["a4"], f32)], axis=1)         # (1, 48)

    # Layer 3: (48, ctx+8) block-diagonal (BN already folded) -> output is the concat.
    W3 = jnp.zeros((h2a + h2b, ctx + o2), f32)
    W3 = W3.at[:h2a, :ctx].set(w3f).at[h2a:, ctx:].set(v3f)
    B3 = jnp.concatenate([b3f, c3f], axis=1)                                 # (1, ctx+8)

    return (W1, B1, A1, W2, B2, A2, W3, B3)


# ------------------------------------------------------------------ wrapper
@functools.partial(jax.jit, static_argnames=("tm",))
def context_mlp_forward(x, prepared, tm=None):
    (W1, B1, A1, W2, B2, A2, W3, B3) = prepared
    B, C = x.shape
    out_dim = W3.shape[1]

    if x.dtype != jnp.float32:
        x = x.astype(jnp.float32)

    # Pad rows only up to the next multiple of 8 (sublane alignment).  Typical
    # large batches are already multiples of 8 -> no extra HBM copy; ragged
    # last grid blocks are handled by Pallas partial-block masking.
    B8 = _round_up(max(B, 8), 8)
    if B8 != B:
        x = jnp.pad(x, ((0, B8 - B), (0, 0)))

    if tm is None:
        # Rows are the streamed M dim; large tiles amortize the ~0.35us/step
        # grid overhead.  Keep >=2 grid steps when possible (v7x: 2 TCs) and
        # cap at 2048 rows so f32 tiles stay well inside v5e's scoped VMEM.
        half = _round_up((B8 + 1) // 2, 8)
        tm = max(8, min(2048, half))
    grid = (pl.cdiv(B8, tm),)

    weight_args = (W1, B1, A1, W2, B2, A2, W3, B3)

    def const_spec(arr):
        # Same block index every grid step -> stays resident in VMEM, no re-DMA.
        return pl.BlockSpec(arr.shape, lambda i: (0, 0))

    in_specs = ([pl.BlockSpec((tm, C), lambda i: (i, 0))]
                + [const_spec(w) for w in weight_args])

    out = pl.pallas_call(
        _context_mlp_kernel,
        out_shape=jax.ShapeDtypeStruct((B8, out_dim), jnp.float32),
        grid=grid,
        in_specs=in_specs,
        out_specs=pl.BlockSpec((tm, out_dim), lambda i: (i, 0)),
        compiler_params=pltpu.CompilerParams(
            dimension_semantics=("parallel",),
            vmem_limit_bytes=32 * 1024 * 1024,
        ),
    )(x, *weight_args)
    return out[:B]


# ------------------------------------------------------------------ reference
def reference_forward(x, p, num_raw, eps=1e-5):
    def prelu(h, a):
        return jnp.where(h >= 0, h, a * h)

    raw = x[:, :num_raw]
    maps = x[:, num_raw:]

    h = prelu(raw @ p["w1"] + p["b1"], p["a1"])
    h = prelu(h @ p["w2"] + p["b2"], p["a2"])
    h = (h - p["bn1_m"]) / jnp.sqrt(p["bn1_v"] + eps) * p["bn1_g"] + p["bn1_b"]
    x1 = h @ p["w3"] + p["b3"]

    g = prelu(maps @ p["v1"] + p["c1"], p["a3"])
    g = prelu(g @ p["v2"] + p["c2"], p["a4"])
    g = (g - p["bn2_m"]) / jnp.sqrt(p["bn2_v"] + eps) * p["bn2_g"] + p["bn2_b"]
    x2 = g @ p["v3"] + p["c3"]
    return jnp.concatenate([x1, x2], axis=1)


if __name__ == "__main__":
    key = jax.random.PRNGKey(0)
    k_param, k_x = jax.random.split(key, 2)

    batch = 4
    num_channels = 12
    num_raw = 8
    context_size = 8

    params = init_params(k_param, num_channels, num_raw, context_size)
    prepared = prepare_params(params)
    x = jax.random.normal(k_x, (batch, num_channels), dtype=jnp.float32)

    out = context_mlp_forward(x, prepared)
    out = jax.block_until_ready(out)

    ref = reference_forward(x, params, num_raw)
    assert out.shape == (batch, context_size + 8), out.shape
    assert bool(jnp.all(jnp.isfinite(out))), "non-finite output"
    assert bool(jnp.allclose(out, ref, atol=1e-4, rtol=1e-4)), (
        f"mismatch vs reference: max abs err {float(jnp.max(jnp.abs(out - ref)))}")
    print("KERNEL_OK")
</pallas_src>

<mosaic_0001>
module attributes {stable_mosaic.version = 11 : i64} {
  func.func @_context_mlp_kernel(%arg0: i32, %arg1: memref<8x12xf32, #tpu.memory_space<vmem>>, %arg2: memref<12x80xf32, #tpu.memory_space<vmem>>, %arg3: memref<1x80xf32, #tpu.memory_space<vmem>>, %arg4: memref<1x80xf32, #tpu.memory_space<vmem>>, %arg5: memref<80x48xf32, #tpu.memory_space<vmem>>, %arg6: memref<1x48xf32, #tpu.memory_space<vmem>>, %arg7: memref<1x48xf32, #tpu.memory_space<vmem>>, %arg8: memref<48x16xf32, #tpu.memory_space<vmem>>, %arg9: memref<1x16xf32, #tpu.memory_space<vmem>>, %arg10: memref<8x16xf32, #tpu.memory_space<vmem>>) attributes {dimension_semantics = [#tpu.dimension_semantics<parallel>], iteration_bounds = array<i64: 1>, scalar_prefetch = 0 : i64, scratch_operands = 0 : i64, tpu.core_type = #tpu.core_type<tc>, window_params = [{transform_indices = @transform_0, window_bounds = array<i64: 8, 12>}, {pipeline_mode = #tpu.pipeline_mode<synchronous>, transform_indices = @transform_1, window_bounds = array<i64: 12, 80>}, {pipeline_mode = #tpu.pipeline_mode<synchronous>, transform_indices = @transform_2, window_bounds = array<i64: 1, 80>}, {pipeline_mode = #tpu.pipeline_mode<synchronous>, transform_indices = @transform_3, window_bounds = array<i64: 1, 80>}, {pipeline_mode = #tpu.pipeline_mode<synchronous>, transform_indices = @transform_4, window_bounds = array<i64: 80, 48>}, {pipeline_mode = #tpu.pipeline_mode<synchronous>, transform_indices = @transform_5, window_bounds = array<i64: 1, 48>}, {pipeline_mode = #tpu.pipeline_mode<synchronous>, transform_indices = @transform_6, window_bounds = array<i64: 1, 48>}, {pipeline_mode = #tpu.pipeline_mode<synchronous>, transform_indices = @transform_7, window_bounds = array<i64: 48, 16>}, {pipeline_mode = #tpu.pipeline_mode<synchronous>, transform_indices = @transform_8, window_bounds = array<i64: 1, 16>}, {transform_indices = @transform_9, window_bounds = array<i64: 8, 16>}]} {
    %c0 = arith.constant 0 : index
    %c0_0 = arith.constant 0 : index
    %0 = vector.load %arg1[%c0, %c0_0] : memref<8x12xf32, #tpu.memory_space<vmem>>, vector<8x12xf32>
    %c0_1 = arith.constant 0 : index
    %c0_2 = arith.constant 0 : index
    %1 = vector.load %arg2[%c0_1, %c0_2] : memref<12x80xf32, #tpu.memory_space<vmem>>, vector<12x80xf32>
    %cst = arith.constant dense<0.000000e+00> : vector<8x80xf32>
    %2 = tpu.matmul %0, %1, %cst {dimension_numbers = #tpu.dot_dimension_numbers<[1], [0], [0], [1], [0, 0, 1, 1], [], []>} : vector<8x12xf32>, vector<12x80xf32>, vector<8x80xf32> -> vector<8x80xf32>
    %c0_3 = arith.constant 0 : index
    %c0_4 = arith.constant 0 : index
    %3 = vector.load %arg3[%c0_3, %c0_4] : memref<1x80xf32, #tpu.memory_space<vmem>>, vector<1x80xf32>
    %4 = vector.broadcast %3 : vector<1x80xf32> to vector<8x80xf32>
    %5 = arith.addf %2, %4 : vector<8x80xf32>
    %cst_5 = arith.constant 0.000000e+00 : f32
    %6 = vector.broadcast %cst_5 : f32 to vector<8x80xf32>
    %7 = arith.cmpf oge, %5, %6 : vector<8x80xf32>
    %c0_6 = arith.constant 0 : index
    %c0_7 = arith.constant 0 : index
    %8 = vector.load %arg4[%c0_6, %c0_7] : memref<1x80xf32, #tpu.memory_space<vmem>>, vector<1x80xf32>
    %9 = vector.broadcast %8 : vector<1x80xf32> to vector<8x80xf32>
    %10 = arith.mulf %9, %5 : vector<8x80xf32>
    %11 = arith.select %7, %5, %10 : vector<8x80xi1>, vector<8x80xf32>
    %c0_8 = arith.constant 0 : index
    %c0_9 = arith.constant 0 : index
    %12 = vector.load %arg5[%c0_8, %c0_9] : memref<80x48xf32, #tpu.memory_space<vmem>>, vector<80x48xf32>
    %cst_10 = arith.constant dense<0.000000e+00> : vector<8x48xf32>
    %13 = tpu.matmul %11, %12, %cst_10 {dimension_numbers = #tpu.dot_dimension_numbers<[1], [0], [0], [1], [0, 0, 1, 1], [], []>} : vector<8x80xf32>, vector<80x48xf32>, vector<8x48xf32> -> vector<8x48xf32>
    %c0_11 = arith.constant 0 : index
    %c0_12 = arith.constant 0 : index
    %14 = vector.load %arg6[%c0_11, %c0_12] : memref<1x48xf32, #tpu.memory_space<vmem>>, vector<1x48xf32>
    %15 = vector.broadcast %14 : vector<1x48xf32> to vector<8x48xf32>
    %16 = arith.addf %13, %15 : vector<8x48xf32>
    %cst_13 = arith.constant 0.000000e+00 : f32
    %17 = vector.broadcast %cst_13 : f32 to vector<8x48xf32>
    %18 = arith.cmpf oge, %16, %17 : vector<8x48xf32>
    %c0_14 = arith.constant 0 : index
    %c0_15 = arith.constant 0 : index
    %19 = vector.load %arg7[%c0_14, %c0_15] : memref<1x48xf32, #tpu.memory_space<vmem>>, vector<1x48xf32>
    %20 = vector.broadcast %19 : vector<1x48xf32> to vector<8x48xf32>
    %21 = arith.mulf %20, %16 : vector<8x48xf32>
    %22 = arith.select %18, %16, %21 : vector<8x48xi1>, vector<8x48xf32>
    %c0_16 = arith.constant 0 : index
    %c0_17 = arith.constant 0 : index
    %23 = vector.load %arg8[%c0_16, %c0_17] : memref<48x16xf32, #tpu.memory_space<vmem>>, vector<48x16xf32>
    %cst_18 = arith.constant dense<0.000000e+00> : vector<8x16xf32>
    %24 = tpu.matmul %22, %23, %cst_18 {dimension_numbers = #tpu.dot_dimension_numbers<[1], [0], [0], [1], [0, 0, 1, 1], [], []>} : vector<8x48xf32>, vector<48x16xf32>, vector<8x16xf32> -> vector<8x16xf32>
    %c0_19 = arith.constant 0 : index
    %c0_20 = arith.constant 0 : index
    %25 = vector.load %arg9[%c0_19, %c0_20] : memref<1x16xf32, #tpu.memory_space<vmem>>, vector<1x16xf32>
    %26 = vector.broadcast %25 : vector<1x16xf32> to vector<8x16xf32>
    %27 = arith.addf %24, %26 : vector<8x16xf32>
    %c0_21 = arith.constant 0 : index
    %c0_22 = arith.constant 0 : index
    %28 = vector.load %arg10[%c0_21, %c0_22] : memref<8x16xf32, #tpu.memory_space<vmem>>, vector<8x16xf32>
    tpu.vector_store %arg10[%c0_21, %c0_22], %27 {strides = array<i32>} : memref<8x16xf32, #tpu.memory_space<vmem>>, vector<8x16xf32>,
    return
  }
  func.func @transform_0(%arg0: i32) -> (i32, i32) {
    %c0_i32 = arith.constant 0 : i32
    %c0_i32_0 = arith.constant 0 : i32
    return %arg0, %c0_i32 : i32, i32
  }
  func.func @transform_1(%arg0: i32) -> (i32, i32) {
    %c0_i32 = arith.constant 0 : i32
    %c0_i32_0 = arith.constant 0 : i32
    %c0_i32_1 = arith.constant 0 : i32
    return %c0_i32, %c0_i32_0 : i32, i32
  }
  func.func @transform_2(%arg0: i32) -> (i32, i32) {
    %c0_i32 = arith.constant 0 : i32
    %c0_i32_0 = arith.constant 0 : i32
    %c0_i32_1 = arith.constant 0 : i32
    return %c0_i32, %c0_i32_0 : i32, i32
  }
  func.func @transform_3(%arg0: i32) -> (i32, i32) {
    %c0_i32 = arith.constant 0 : i32
    %c0_i32_0 = arith.constant 0 : i32
    %c0_i32_1 = arith.constant 0 : i32
    return %c0_i32, %c0_i32_0 : i32, i32
  }
  func.func @transform_4(%arg0: i32) -> (i32, i32) {
    %c0_i32 = arith.constant 0 : i32
    %c0_i32_0 = arith.constant 0 : i32
    %c0_i32_1 = arith.constant 0 : i32
    return %c0_i32, %c0_i32_0 : i32, i32
  }
  func.func @transform_5(%arg0: i32) -> (i32, i32) {
    %c0_i32 = arith.constant 0 : i32
    %c0_i32_0 = arith.constant 0 : i32
    %c0_i32_1 = arith.constant 0 : i32
    return %c0_i32, %c0_i32_0 : i32, i32
  }
  func.func @transform_6(%arg0: i32) -> (i32, i32) {
    %c0_i32 = arith.constant 0 : i32
    %c0_i32_0 = arith.constant 0 : i32
    %c0_i32_1 = arith.constant 0 : i32
    return %c0_i32, %c0_i32_0 : i32, i32
  }
  func.func @transform_7(%arg0: i32) -> (i32, i32) {
    %c0_i32 = arith.constant 0 : i32
    %c0_i32_0 = arith.constant 0 : i32
    %c0_i32_1 = arith.constant 0 : i32
    return %c0_i32, %c0_i32_0 : i32, i32
  }
  func.func @transform_8(%arg0: i32) -> (i32, i32) {
    %c0_i32 = arith.constant 0 : i32
    %c0_i32_0 = arith.constant 0 : i32
    %c0_i32_1 = arith.constant 0 : i32
    return %c0_i32, %c0_i32_0 : i32, i32
  }
  func.func @transform_9(%arg0: i32) -> (i32, i32) {
    %c0_i32 = arith.constant 0 : i32
    %c0_i32_0 = arith.constant 0 : i32
    return %arg0, %c0_i32 : i32, i32
  }
}

</mosaic_0001>

<llo_original>
// kernel: context_mlp_forward.1
$region0: #{context_mlp_forward.1}
  #allocation0 [shape = 'u32[]', space=smem, size = 0x4, offset = 0x4, fixed_abs, tag = 'smem constant byte address 0x4 - core index']
  #allocation1 [shape = 'u32[144,128]{1,0:T(1,128)}', space=vmem, size = 0x12000, scoped, tag = 'internal scratch']
  %s0 = inlined_call_operand.vmem [shape: f32[8,12], index: 0, kind: input, shape index: {}]
  %s1 = inlined_call_operand.vmem [shape: f32[12,80], index: 1, kind: input, shape index: {}]
  %s2 = inlined_call_operand.vmem [shape: f32[1,80], index: 2, kind: input, shape index: {}]
  %s3 = inlined_call_operand.vmem [shape: f32[1,80], index: 3, kind: input, shape index: {}]
  %s4 = inlined_call_operand.vmem [shape: f32[80,48], index: 4, kind: input, shape index: {}]
  %s5 = inlined_call_operand.vmem [shape: f32[1,48], index: 5, kind: input, shape index: {}]
  %s6 = inlined_call_operand.vmem [shape: f32[1,48], index: 6, kind: input, shape index: {}]
  %s7 = inlined_call_operand.vmem [shape: f32[48,16], index: 7, kind: input, shape index: {}]
  %s8 = inlined_call_operand.vmem [shape: f32[1,16], index: 8, kind: input, shape index: {}]
  %s9 = inlined_call_operand.vmem [shape: f32[8,16], index: 9, kind: output, shape index: {}]
  %s10 = sld [smem:[#allocation0]]
  $region46: #{context_mlp_forward.1} parent=0
    _
  %s12 = ssub.s32 1, %s10
  %s13 = scalar_select 0, %s12, %s10
  // Predicated region
  $region2: #{context_mlp_forward.1} parent=0 // pred_check
    _
  $region3: #{context_mlp_forward.1} parent=0 // pred_check_branch
    %15 = sbr.rel (0) target = $region5
  $region4: #{context_mlp_forward.1} parent=0 // pred_region
    _
  $region5: #{context_mlp_forward.1} parent=0 // pred_fallthru
    _
  // Predicated region
  $region6: #{context_mlp_forward.1} parent=0 // pred_check
    _
  $region7: #{context_mlp_forward.1} parent=0 // pred_check_branch
    %17 = sbr.rel (0) target = $region9
  $region8: #{context_mlp_forward.1} parent=0 // pred_region
    _
  $region9: #{context_mlp_forward.1} parent=0 // pred_fallthru
    _
  // Predicated region
  $region10: #{context_mlp_forward.1} parent=0 // pred_check
    _
  $region11: #{context_mlp_forward.1} parent=0 // pred_check_branch
    %19 = sbr.rel (0) target = $region13
  $region12: #{context_mlp_forward.1} parent=0 // pred_region
    _
  $region13: #{context_mlp_forward.1} parent=0 // pred_fallthru
    _
  // Predicated region
  $region14: #{context_mlp_forward.1} parent=0 // pred_check
    _
  $region15: #{context_mlp_forward.1} parent=0 // pred_check_branch
    %21 = sbr.rel (0) target = $region17
  $region16: #{context_mlp_forward.1} parent=0 // pred_region
    _
  $region17: #{context_mlp_forward.1} parent=0 // pred_fallthru
    _
  // Predicated region
  $region18: #{context_mlp_forward.1} parent=0 // pred_check
    _
  $region19: #{context_mlp_forward.1} parent=0 // pred_check_branch
    %23 = sbr.rel (0) target = $region21
  $region20: #{context_mlp_forward.1} parent=0 // pred_region
    _
  $region21: #{context_mlp_forward.1} parent=0 // pred_fallthru
    _
  // Predicated region
  $region22: #{context_mlp_forward.1} parent=0 // pred_check
    _
  $region23: #{context_mlp_forward.1} parent=0 // pred_check_branch
    %25 = sbr.rel (0) target = $region25
  $region24: #{context_mlp_forward.1} parent=0 // pred_region
    _
  $region25: #{context_mlp_forward.1} parent=0 // pred_fallthru
    _
  // Predicated region
  $region26: #{context_mlp_forward.1} parent=0 // pred_check
    _
  $region27: #{context_mlp_forward.1} parent=0 // pred_check_branch
    %27 = sbr.rel (0) target = $region29
  $region28: #{context_mlp_forward.1} parent=0 // pred_region
    _
  $region29: #{context_mlp_forward.1} parent=0 // pred_fallthru
    _
  // Predicated region
  $region30: #{context_mlp_forward.1} parent=0 // pred_check
    _
  $region31: #{context_mlp_forward.1} parent=0 // pred_check_branch
    %29 = sbr.rel (0) target = $region33
  $region32: #{context_mlp_forward.1} parent=0 // pred_region
    _
  $region33: #{context_mlp_forward.1} parent=0 // pred_fallthru
    _
  // Predicated region
  $region34: #{context_mlp_forward.1} parent=0 // pred_check
    _
  $region35: #{context_mlp_forward.1} parent=0 // pred_check_branch
    %31 = sbr.rel (0) target = $region37
  $region36: #{context_mlp_forward.1} parent=0 // pred_region
    _
  $region37: #{context_mlp_forward.1} parent=0 // pred_fallthru
    _
  %v32 = vld [vmem:[%s0] sm:$0xff]
  %v33 = vld [vmem:[%s1] sm:$0xff]
  %v34 = vld [vmem:[%s1 + $0x8] sm:$0xf]
  %v35 = vld [vmem:[%s2] sm:$0x1]
  %v37 = vlaneseq
  %v38 = vshrl.u32 %v37, 7
  %v39 = vsub.s32 0, %v38
  %v40 = vrot.slane %v35, %v39
  %vm42 = vcmask 97280
  %v44 = vsel %vm42, %v32, 0
  %vm46 = vcmask 1043456
  %v48 = vsel %vm46, %v34, 0
  %50 = vmatprep.subr.mxu0 0.0
  %51 = vmatpush1.msra.mxu0 0.0
  %52 = vmatprep.subr.mxu0 0.0
  %53 = vmatpush1.msra.mxu0 0.0
  %54 = vmatprep.subr.mxu0 0.0
  %55 = vmatpush1.msra.mxu0 0.0
  %56 = vmatprep.subr.mxu0 0.0
  %57 = vmatpush1.msra.mxu0 0.0
  %58 = vmatprep.subr.mxu0 0.0
  %59 = vmatpush1.msra.mxu0 0.0
  %60 = vmatprep.subr.mxu0 0.0
  %61 = vmatpush1.msra.mxu0 0.0
  %62 = vmatprep.subr.mxu0 0.0
  %63 = vmatpush1.msra.mxu0 0.0
  %64 = vmatprep.subr.mxu0 0.0
  %65 = vmatpush1.msra.mxu0 0.0
  %66 = vmatprep.subr.mxu0 0.0
  %67 = vmatpush1.msra.mxu0 0.0
  %68 = vmatprep.subr.mxu0 0.0
  %69 = vmatpush1.msra.mxu0 0.0
  %70 = vmatprep.subr.mxu0 0.0
  %71 = vmatpush1.msra.mxu0 0.0
  %72 = vmatprep.subr.mxu0 0.0
  %73 = vmatpush1.msra.mxu0 0.0
  %74 = vmatprep.subr.mxu0 0.0
  %75 = vmatpush1.msra.mxu0 0.0
  %76 = vmatprep.subr.mxu0 0.0
  %77 = vmatpush1.msra.mxu0 0.0
  %78 = vmatprep.subr.mxu0 0.0
  %79 = vmatpush1.msra.mxu0 %v48
  %80 = vmatprep.subr.mxu0 0.0
  %81 = vmatpush1.msra.mxu0 %v33
  %82 = vmatprep.subr.mxu0 0.0
  %83 = vmatpush2.msra.mxu0 0.0
  %84 = vmatprep.subr.mxu0 0.0
  %85 = vmatpush2.msra.mxu0 0.0
  %86 = vmatprep.subr.mxu0 0.0
  %87 = vmatpush2.msra.mxu0 0.0
  %88 = vmatprep.subr.mxu0 0.0
  %89 = vmatpush2.msra.mxu0 0.0
  %90 = vmatprep.subr.mxu0 0.0
  %91 = vmatpush2.msra.mxu0 0.0
  %92 = vmatprep.subr.mxu0 0.0
  %93 = vmatpush2.msra.mxu0 0.0
  %94 = vmatprep.subr.mxu0 0.0
  %95 = vmatpush2.msra.mxu0 0.0
  %96 = vmatprep.subr.mxu0 0.0
  %97 = vmatpush2.msra.mxu0 0.0
  %98 = vmatprep.subr.mxu0 0.0
  %99 = vmatpush2.msra.mxu0 0.0
  %100 = vmatprep.subr.mxu0 0.0
  %101 = vmatpush2.msra.mxu0 0.0
  %102 = vmatprep.subr.mxu0 0.0
  %103 = vmatpush2.msra.mxu0 0.0
  %104 = vmatprep.subr.mxu0 0.0
  %105 = vmatpush2.msra.mxu0 0.0
  %106 = vmatprep.subr.mxu0 0.0
  %107 = vmatpush2.msra.mxu0 0.0
  %108 = vmatprep.subr.mxu0 0.0
  %109 = vmatpush2.msra.mxu0 0.0
  %110 = vmatprep.subr.mxu0 0.0
  %111 = vmatpush2.msra.mxu0 0.0
  %112 = vmatprep.subr.mxu0 0.0
  %113 = vmatpush2.msra.mxu0 0.0
  %114 = vmatprep.mubr.f32.mxu0 0.0
  %115 = vmatmul.mubr.f32.gmra.mxu0 %v44
  %v116 = vpop.f32.mrf.mxu0
  %v117 = vadd.f32 %v40, %v116
  %v118 = vpop.f32.mrf.mxu0
  %119 = vdwg.mxu0
  %vm120 = vcmp.ge.f32.partialorder %v117, 0.0
  %v121 = vld [vmem:[%s3] sm:$0x1]
  %v123 = vlaneseq
  %v124 = vshrl.u32 %v123, 7
  %v125 = vsub.s32 0, %v124
  %v126 = vrot.slane %v121, %v125
  %v128 = vmul.f32 %v126, %v117
  %v129 = vsel %vm120, %v117, %v128
  %v130 = vld [vmem:[%s4] sm:$0xff]
  %v131 = vld [vmem:[%s4 + $0x8] sm:$0xff]
  %v132 = vld [vmem:[%s4 + $0x10] sm:$0xff]
  %v133 = vld [vmem:[%s4 + $0x18] sm:$0xff]
  %v134 = vld [vmem:[%s4 + $0x20] sm:$0xff]
  %v135 = vld [vmem:[%s4 + $0x28] sm:$0xff]
  %v136 = vld [vmem:[%s4 + $0x30] sm:$0xff]
  %v137 = vld [vmem:[%s4 + $0x38] sm:$0xff]
  %v138 = vld [vmem:[%s4 + $0x40] sm:$0xff]
  %v139 = vld [vmem:[%s4 + $0x48] sm:$0xff]
  %v140 = vld [vmem:[%s5] sm:$0x1]
  %v142 = vlaneseq
  %v143 = vshrl.u32 %v142, 7
  %v144 = vsub.s32 0, %v143
  %v145 = vrot.slane %v140, %v144
  %vm147 = vcmask 654336
  %v149 = vsel %vm147, %v129, 0
  %151 = vmatprep.subr.mxu0 0.0
  %152 = vmatpush1.msra.mxu0 0.0
  %153 = vmatprep.subr.mxu0 0.0
  %154 = vmatpush1.msra.mxu0 0.0
  %155 = vmatprep.subr.mxu0 0.0
  %156 = vmatpush1.msra.mxu0 0.0
  %157 = vmatprep.subr.mxu0 0.0
  %158 = vmatpush1.msra.mxu0 0.0
  %159 = vmatprep.subr.mxu0 0.0
  %160 = vmatpush1.msra.mxu0 0.0
  %161 = vmatprep.subr.mxu0 0.0
  %162 = vmatpush1.msra.mxu0 0.0
  %163 = vmatprep.subr.mxu0 0.0
  %164 = vmatpush1.msra.mxu0 %v139
  %165 = vmatprep.subr.mxu0 0.0
  %166 = vmatpush1.msra.mxu0 %v138
  %167 = vmatprep.subr.mxu0 0.0
  %168 = vmatpush1.msra.mxu0 %v137
  %169 = vmatprep.subr.mxu0 0.0
  %170 = vmatpush1.msra.mxu0 %v136
  %171 = vmatprep.subr.mxu0 0.0
  %172 = vmatpush1.msra.mxu0 %v135
  %173 = vmatprep.subr.mxu0 0.0
  %174 = vmatpush1.msra.mxu0 %v134
  %175 = vmatprep.subr.mxu0 0.0
  %176 = vmatpush1.msra.mxu0 %v133
  %177 = vmatprep.subr.mxu0 0.0
  %178 = vmatpush1.msra.mxu0 %v132
  %179 = vmatprep.subr.mxu0 0.0
  %180 = vmatpush1.msra.mxu0 %v131
  %181 = vmatprep.subr.mxu0 0.0
  %182 = vmatpush1.msra.mxu0 %v130
  %183 = vmatprep.subr.mxu0 0.0
  %184 = vmatpush2.msra.mxu0 0.0
  %185 = vmatprep.subr.mxu0 0.0
  %186 = vmatpush2.msra.mxu0 0.0
  %187 = vmatprep.subr.mxu0 0.0
  %188 = vmatpush2.msra.mxu0 0.0
  %189 = vmatprep.subr.mxu0 0.0
  %190 = vmatpush2.msra.mxu0 0.0
  %191 = vmatprep.subr.mxu0 0.0
  %192 = vmatpush2.msra.mxu0 0.0
  %193 = vmatprep.subr.mxu0 0.0
  %194 = vmatpush2.msra.mxu0 0.0
  %195 = vmatprep.subr.mxu0 0.0
  %196 = vmatpush2.msra.mxu0 0.0
  %197 = vmatprep.subr.mxu0 0.0
  %198 = vmatpush2.msra.mxu0 0.0
  %199 = vmatprep.subr.mxu0 0.0
  %200 = vmatpush2.msra.mxu0 0.0
  %201 = vmatprep.subr.mxu0 0.0
  %202 = vmatpush2.msra.mxu0 0.0
  %203 = vmatprep.subr.mxu0 0.0
  %204 = vmatpush2.msra.mxu0 0.0
  %205 = vmatprep.subr.mxu0 0.0
  %206 = vmatpush2.msra.mxu0 0.0
  %207 = vmatprep.subr.mxu0 0.0
  %208 = vmatpush2.msra.mxu0 0.0
  %209 = vmatprep.subr.mxu0 0.0
  %210 = vmatpush2.msra.mxu0 0.0
  %211 = vmatprep.subr.mxu0 0.0
  %212 = vmatpush2.msra.mxu0 0.0
  %213 = vmatprep.subr.mxu0 0.0
  %214 = vmatpush2.msra.mxu0 0.0
  %215 = vmatprep.mubr.f32.mxu0 0.0
  %216 = vmatmul.mubr.f32.gmra.mxu0 %v149
  %v217 = vpop.f32.mrf.mxu0
  %v218 = vadd.f32 %v145, %v217
  %v219 = vpop.f32.mrf.mxu0
  %220 = vdwg.mxu0
  %vm221 = vcmp.ge.f32.partialorder %v218, 0.0
  %v222 = vld [vmem:[%s6] sm:$0x1]
  %v224 = vlaneseq
  %v225 = vshrl.u32 %v224, 7
  %v226 = vsub.s32 0, %v225
  %v227 = vrot.slane %v222, %v226
  %v229 = vmul.f32 %v227, %v218
  %v230 = vsel %vm221, %v218, %v229
  %v231 = vld [vmem:[%s7] sm:$0xff]
  %v232 = vld [vmem:[%s7 + $0x8] sm:$0xff]
  %v233 = vld [vmem:[%s7 + $0x10] sm:$0xff]
  %v234 = vld [vmem:[%s7 + $0x18] sm:$0xff]
  %v235 = vld [vmem:[%s7 + $0x20] sm:$0xff]
  %v236 = vld [vmem:[%s7 + $0x28] sm:$0xff]
  %v237 = vld [vmem:[%s8] sm:$0x1]
  %v239 = vlaneseq
  %v240 = vshrl.u32 %v239, 7
  %v241 = vsub.s32 0, %v240
  %v242 = vrot.slane %v237, %v241
  %vm244 = vcmask 392192
  %v246 = vsel %vm244, %v230, 0
  %248 = vmatprep.subr.mxu0 0.0
  %249 = vmatpush1.msra.mxu0 0.0
  %250 = vmatprep.subr.mxu0 0.0
  %251 = vmatpush1.msra.mxu0 0.0
  %252 = vmatprep.subr.mxu0 0.0
  %253 = vmatpush1.msra.mxu0 0.0
  %254 = vmatprep.subr.mxu0 0.0
  %255 = vmatpush1.msra.mxu0 0.0
  %256 = vmatprep.subr.mxu0 0.0
  %257 = vmatpush1.msra.mxu0 0.0
  %258 = vmatprep.subr.mxu0 0.0
  %259 = vmatpush1.msra.mxu0 0.0
  %260 = vmatprep.subr.mxu0 0.0
  %261 = vmatpush1.msra.mxu0 0.0
  %262 = vmatprep.subr.mxu0 0.0
  %263 = vmatpush1.msra.mxu0 0.0
  %264 = vmatprep.subr.mxu0 0.0
  %265 = vmatpush1.msra.mxu0 0.0
  %266 = vmatprep.subr.mxu0 0.0
  %267 = vmatpush1.msra.mxu0 0.0
  %268 = vmatprep.subr.mxu0 0.0
  %269 = vmatpush1.msra.mxu0 %v236
  %270 = vmatprep.subr.mxu0 0.0
  %271 = vmatpush1.msra.mxu0 %v235
  %272 = vmatprep.subr.mxu0 0.0
  %273 = vmatpush1.msra.mxu0 %v234
  %274 = vmatprep.subr.mxu0 0.0
  %275 = vmatpush1.msra.mxu0 %v233
  %276 = vmatprep.subr.mxu0 0.0
  %277 = vmatpush1.msra.mxu0 %v232
  %278 = vmatprep.subr.mxu0 0.0
  %279 = vmatpush1.msra.mxu0 %v231
  %280 = vmatprep.subr.mxu0 0.0
  %281 = vmatpush2.msra.mxu0 0.0
  %282 = vmatprep.subr.mxu0 0.0
  %283 = vmatpush2.msra.mxu0 0.0
  %284 = vmatprep.subr.mxu0 0.0
  %285 = vmatpush2.msra.mxu0 0.0
  %286 = vmatprep.subr.mxu0 0.0
  %287 = vmatpush2.msra.mxu0 0.0
  %288 = vmatprep.subr.mxu0 0.0
  %289 = vmatpush2.msra.mxu0 0.0
  %290 = vmatprep.subr.mxu0 0.0
  %291 = vmatpush2.msra.mxu0 0.0
  %292 = vmatprep.subr.mxu0 0.0
  %293 = vmatpush2.msra.mxu0 0.0
  %294 = vmatprep.subr.mxu0 0.0
  %295 = vmatpush2.msra.mxu0 0.0
  %296 = vmatprep.subr.mxu0 0.0
  %297 = vmatpush2.msra.mxu0 0.0
  %298 = vmatprep.subr.mxu0 0.0
  %299 = vmatpush2.msra.mxu0 0.0
  %300 = vmatprep.subr.mxu0 0.0
  %301 = vmatpush2.msra.mxu0 0.0
  %302 = vmatprep.subr.mxu0 0.0
  %303 = vmatpush2.msra.mxu0 0.0
  %304 = vmatprep.subr.mxu0 0.0
  %305 = vmatpush2.msra.mxu0 0.0
  %306 = vmatprep.subr.mxu0 0.0
  %307 = vmatpush2.msra.mxu0 0.0
  %308 = vmatprep.subr.mxu0 0.0
  %309 = vmatpush2.msra.mxu0 0.0
  %310 = vmatprep.subr.mxu0 0.0
  %311 = vmatpush2.msra.mxu0 0.0
  %312 = vmatprep.mubr.f32.mxu0 0.0
  %313 = vmatmul.mubr.f32.gmra.mxu0 %v246
  %v314 = vpop.f32.mrf.mxu0
  %v315 = vadd.f32 %v242, %v314
  %v316 = vpop.f32.mrf.mxu0
  %317 = vdwg.mxu0
  %vm318 = vcmask 130048
  %319 = vst.msk [vmem:[%s9] sm:$0xff] %vm318, %v315
  // Predicated region
  $region38: #{context_mlp_forward.1} parent=0 // pred_check
    _
  $region39: #{context_mlp_forward.1} parent=0 // pred_check_branch
    %321 = sbr.rel (0) target = $region41
  $region40: #{context_mlp_forward.1} parent=0 // pred_region
    _
  $region41: #{context_mlp_forward.1} parent=0 // pred_fallthru
    _
  // Predicated region
  $region42: #{context_mlp_forward.1} parent=0 // pred_check
    _
  $region43: #{context_mlp_forward.1} parent=0 // pred_check_branch
    %323 = sbr.rel (0) target = $region45
  $region44: #{context_mlp_forward.1} parent=0 // pred_region
    _
  $region45: #{context_mlp_forward.1} parent=0 // pred_fallthru
    _

</llo_original>
